<compile_context>
chip_gen: v5e
topology: v5e:2x2
jax: 0.10.0
libtpu: 0.0.40
codegen_flags: <defaults>
</compile_context>

<pallas_src>
import functools
import math

import jax
import jax.numpy as jnp
from jax.experimental import pallas as pl
from jax.experimental.pallas import tpu as pltpu


def _rmsnorm_kernel(x_ref, w_ref, o_ref, *, eps):
    # x_ref: (TM, dim) token tile   w_ref: (1, dim) resident weight (x.dtype)
    xf = x_ref[...].astype(jnp.float32)                      # f32 math (VPU)
    ms = jnp.mean(xf * xf, axis=-1, keepdims=True)           # (TM, 1) XLU reduce
    inv = jax.lax.rsqrt(ms + eps)                            # EUP rsqrt
    # Recompute the cheap upcast instead of keeping `xf` live across the
    # reduction (keeps vreg pressure down on big tiles).
    normed = (x_ref[...].astype(jnp.float32) * inv).astype(x_ref.dtype)  # .type_as(x)
    o_ref[...] = normed * w_ref[...]


def _round_up(n, m):
    return ((n + m - 1) // m) * m


def _sublane_multiple(dtype):
    bits = jnp.dtype(dtype).itemsize * 8
    if bits >= 32:
        return 8
    if bits == 16:
        return 16
    return 32


def _pick_tile_m(tokens, dim, dtype, tile_m):
    """Pick a sublane-aligned token tile sized from the VMEM budget."""
    sub = _sublane_multiple(dtype)
    bytes_per = jnp.dtype(dtype).itemsize
    row_bytes = dim * bytes_per

    # 2 input + 2 output double-buffers must fit a ~40 MiB budget
    # (safe on v7x's 64 MiB VMEM/TC; generous on v5e/v6e's 128 MiB).
    vmem_budget = 40 * 1024 * 1024
    max_tm_vmem = max(sub, vmem_budget // (4 * row_bytes))

    # Target ~4 MiB per x block: big enough to amortize the ~0.35 us per-step
    # pipeline overhead and sit near the HBM roofline.
    target_tm = max(sub, (4 * 1024 * 1024) // row_bytes)

    tm = min(max_tm_vmem, target_tm)
    if tile_m is not None:
        tm = min(tm, max(sub, int(tile_m)))
    # Never exceed (rounded-up) token count; keep sublane alignment.
    tm = min(tm, _round_up(tokens, sub))
    tm = max(sub, (tm // sub) * sub)

    # v7x has 2 TensorCores sharding the "parallel" grid axis: make sure we
    # emit at least 2 grid steps whenever the token count allows it.
    if pl.cdiv(tokens, tm) < 2 and tokens > sub:
        tm = max(sub, _round_up(pl.cdiv(tokens, 2), sub))
    return tm


@functools.partial(jax.jit, static_argnames=("eps", "tile_m"))
def rmsnorm(x, weight, *, eps=1e-6, tile_m=None):
    """RMSNorm over the last dim of x, scaled by weight (shape (dim,))."""
    orig_shape = x.shape
    dim = orig_shape[-1]
    tokens = math.prod(orig_shape[:-1])

    x2d = x.reshape(tokens, dim)
    # One-time cast, hoisted out of the grid loop.
    w2d = weight.astype(x.dtype).reshape(1, dim)

    tm = _pick_tile_m(tokens, dim, x.dtype, tile_m)
    grid = (pl.cdiv(tokens, tm),)   # partial last block handled by Pallas

    out = pl.pallas_call(
        functools.partial(_rmsnorm_kernel, eps=eps),
        out_shape=jax.ShapeDtypeStruct((tokens, dim), x.dtype),
        grid_spec=pltpu.PrefetchScalarGridSpec(
            num_scalar_prefetch=0,
            grid=grid,
            in_specs=[
                pl.BlockSpec((tm, dim), lambda i: (i, 0)),   # token tile
                pl.BlockSpec((1, dim), lambda i: (0, 0)),    # weight (resident)
            ],
            out_specs=pl.BlockSpec((tm, dim), lambda i: (i, 0)),
        ),
        compiler_params=pltpu.CompilerParams(
            dimension_semantics=("parallel",),
            vmem_limit_bytes=48 * 1024 * 1024,
        ),
    )(x2d, w2d)

    return out.reshape(orig_shape)


def _reference(x, weight, eps=1e-6):
    xf = x.astype(jnp.float32)
    normed = xf * jax.lax.rsqrt(jnp.mean(xf * xf, axis=-1, keepdims=True) + eps)
    return normed.astype(x.dtype) * weight.astype(x.dtype)


if __name__ == "__main__":
    key = jax.random.PRNGKey(0)
    kx, kw, kx2, kx3 = jax.random.split(key, 4)

    # Main test: lane-aligned dim (multiple of 128), f32.
    batch, seq, dim = 2, 8, 256
    x = jax.random.normal(kx, (batch, seq, dim), jnp.float32)
    weight = 1.0 + 0.1 * jax.random.normal(kw, (dim,), jnp.float32)

    y = jax.block_until_ready(rmsnorm(x, weight, eps=1e-6))
    assert y.shape == (batch, seq, dim)
    assert jnp.allclose(y, _reference(x, weight), atol=1e-5, rtol=1e-5)

    # Ragged token count -> partial last block (no wrapper pad/slice).
    x2 = jax.random.normal(kx2, (3, 5, dim), jnp.float32)
    y2 = jax.block_until_ready(rmsnorm(x2, weight, eps=1e-6))
    assert jnp.allclose(y2, _reference(x2, weight), atol=1e-5, rtol=1e-5)

    # bf16 input exercises the 16-row sublane multiple.
    x3 = jax.random.normal(kx3, (batch, seq, dim), jnp.bfloat16)
    y3 = jax.block_until_ready(rmsnorm(x3, weight, eps=1e-6))
    assert jnp.allclose(y3.astype(jnp.float32),
                        _reference(x3, weight).astype(jnp.float32),
                        atol=2e-2, rtol=2e-2)

    print("KERNEL_OK")
</pallas_src>

<mosaic_0001>
module attributes {stable_mosaic.version = 11 : i64} {
  func.func @_rmsnorm_kernel(%arg0: i32, %arg1: memref<8x256xf32, #tpu.memory_space<vmem>>, %arg2: memref<1x256xf32, #tpu.memory_space<vmem>>, %arg3: memref<8x256xf32, #tpu.memory_space<vmem>>) attributes {dimension_semantics = [#tpu.dimension_semantics<parallel>], iteration_bounds = array<i64: 2>, scalar_prefetch = 0 : i64, scratch_operands = 0 : i64, tpu.core_type = #tpu.core_type<tc>, window_params = [{transform_indices = @transform_0, window_bounds = array<i64: 8, 256>}, {pipeline_mode = #tpu.pipeline_mode<synchronous>, transform_indices = @transform_1, window_bounds = array<i64: 1, 256>}, {transform_indices = @transform_2, window_bounds = array<i64: 8, 256>}]} {
    %c0 = arith.constant 0 : index
    %c0_0 = arith.constant 0 : index
    %0 = vector.load %arg1[%c0, %c0_0] : memref<8x256xf32, #tpu.memory_space<vmem>>, vector<8x256xf32>
    %1 = arith.mulf %0, %0 : vector<8x256xf32>
    %cst = arith.constant dense<0.000000e+00> : vector<8xf32>
    %2 = vector.multi_reduction <add>, %1, %cst [1] : vector<8x256xf32> to vector<8xf32>
    %3 = vector.shape_cast %2 : vector<8xf32> to vector<8x1xf32>
    %cst_1 = arith.constant 2.560000e+02 : f32
    %4 = vector.broadcast %cst_1 : f32 to vector<8x1xf32>
    %5 = arith.divf %3, %4 : vector<8x1xf32>
    %cst_2 = arith.constant 9.99999997E-7 : f32
    %6 = vector.broadcast %cst_2 : f32 to vector<8x1xf32>
    %7 = arith.addf %5, %6 : vector<8x1xf32>
    %8 = math.rsqrt %7 : vector<8x1xf32>
    %c0_3 = arith.constant 0 : index
    %c0_4 = arith.constant 0 : index
    %9 = vector.load %arg1[%c0_3, %c0_4] : memref<8x256xf32, #tpu.memory_space<vmem>>, vector<8x256xf32>
    %10 = vector.broadcast %8 : vector<8x1xf32> to vector<8x256xf32>
    %11 = arith.mulf %9, %10 : vector<8x256xf32>
    %c0_5 = arith.constant 0 : index
    %c0_6 = arith.constant 0 : index
    %12 = vector.load %arg2[%c0_5, %c0_6] : memref<1x256xf32, #tpu.memory_space<vmem>>, vector<1x256xf32>
    %13 = vector.broadcast %12 : vector<1x256xf32> to vector<8x256xf32>
    %14 = arith.mulf %11, %13 : vector<8x256xf32>
    %c0_7 = arith.constant 0 : index
    %c0_8 = arith.constant 0 : index
    %15 = vector.load %arg3[%c0_7, %c0_8] : memref<8x256xf32, #tpu.memory_space<vmem>>, vector<8x256xf32>
    tpu.vector_store %arg3[%c0_7, %c0_8], %14 {strides = array<i32>} : memref<8x256xf32, #tpu.memory_space<vmem>>, vector<8x256xf32>,
    return
  }
  func.func @transform_0(%arg0: i32) -> (i32, i32) {
    %c0_i32 = arith.constant 0 : i32
    %c0_i32_0 = arith.constant 0 : i32
    return %arg0, %c0_i32 : i32, i32
  }
  func.func @transform_1(%arg0: i32) -> (i32, i32) {
    %c0_i32 = arith.constant 0 : i32
    %c0_i32_0 = arith.constant 0 : i32
    %c0_i32_1 = arith.constant 0 : i32
    return %c0_i32, %c0_i32_0 : i32, i32
  }
  func.func @transform_2(%arg0: i32) -> (i32, i32) {
    %c0_i32 = arith.constant 0 : i32
    %c0_i32_0 = arith.constant 0 : i32
    return %arg0, %c0_i32 : i32, i32
  }
}

</mosaic_0001>

<llo_original>
// kernel: rmsnorm.1
$region0: #{rmsnorm.1}
  #allocation0 [shape = 'u32[]', space=smem, size = 0x4, offset = 0x4, fixed_abs, tag = 'smem constant byte address 0x4 - core index']
  #allocation1 [shape = 'u32[72,128]{1,0:T(1,128)}', space=vmem, size = 0x9000, scoped, tag = 'internal scratch']
  %s0 = inlined_call_operand.hbm [shape: f32[16,256], index: 0, kind: input, shape index: {}]
  %s1 = inlined_call_operand.vmem [shape: f32[1,256], index: 1, kind: input, shape index: {}]
  %s2 = inlined_call_operand.hbm [shape: f32[16,256], index: 2, kind: output, shape index: {}]
  %s3 = sld [smem:[#allocation0]]
  $region45: #{rmsnorm.1} parent=0
    _
  %s5 = ssub.s32 1, %s3
  %s6 = scalar_select 0, %s5, %s3
  $region1: #{rmsnorm.1} parent=0
    #allocation2 [shape = 'u8[16384]{0}', space=vmem, size = 0x4000, scoped, tag = 'input window, operand 0']
    #allocation3 [shape = 's32[2]{0}', space=sflag, size = 0x8, scoped, tag = 'scoped memory for rmsnorm.1']
    #allocation4 [shape = 's32[2]{0}', space=sflag, size = 0x8, scoped, tag = 'scoped memory for rmsnorm.1']
    #allocation5 [shape = 'u8[16384]{0}', space=vmem, size = 0x4000, scoped, tag = 'output window, operand 0']
    %7 = vsyncpa [#allocation3], 0
    %s8 = scalar_lea.sflag [#allocation3], 1
    %9 = vsyncpa %s8, 0
    %10 = vsyncpa [#allocation4], 0
    %s11 = scalar_lea.sflag [#allocation4], 1
    %12 = vsyncpa %s11, 0
    loop: start=0, step=1, limit=4
    $region2: #{rmsnorm.1} parent=1 // loop_pre_header
      _
    $region3: #{rmsnorm.1} parent=1 // loop_header
      %s14 = sphi 0, %s18
      %p15 = scmp.ge.s32.totalorder %s14, 4
      %s24 = sphi 0, %s26
      %s27 = sphi 0, %s24
      %s28 = sphi 0, %s27
      %s44 = sphi 0, %s28
      %s48 = sphi 0, %s48
      %s50 = sphi 0, %s48
      %s51 = sphi 0, %s50
      %s65 = sphi 0, %s51
      %s71 = sphi 0, %s73
      %s74 = sphi 0, %s71
      %s75 = sphi 0, %s74
      %s91 = sphi 0, %s75
    $region4: #{rmsnorm.1} parent=1 // loop_header_branch
      %17 = sbr.rel (%p15) target = $region8
    $region5: #{rmsnorm.1} parent=1 // loop_body
      %s19 = ssub.s32 %s14, 1
      %s20 = ssub.s32 %s14, 2
      %s21 = sadd.s32 %s14, 1
      %s22 = ssub.s32 %s14, %s21
      %p23 = scmp.eq.s32.totalorder %s22, 0
      %s25 = sadd.s32 %s24, 1
      %s26 = scalar_select %p23, %s24, %s25
      %p29 = pneg %p23
      %p30 = scmp.eq.s32.totalorder %s14, 1
      %p31 = por %p29, %p30
      %p32 = scmp.ne.s32.totalorder %s24, %s27
      %p33 = scmp.eq.s32.totalorder %s14, 0
      %p34 = por %p32, %p33
      %p35 = scmp.ne.s32.totalorder %s24, %s27
      %p36 = scmp.eq.s32.totalorder %s19, 1
      %p37 = por %p35, %p36
      %p38 = scmp.ne.s32.totalorder %s27, %s28
      %p39 = scmp.eq.s32.totalorder %s19, 0
      %p40 = por %p38, %p39
      %p41 = scmp.ne.s32.totalorder %s27, %s28
      %p42 = scmp.eq.s32.totalorder %s20, 1
      %p43 = por %p41, %p42
      %p45 = scmp.ne.s32.totalorder %s28, %s44
      %p46 = scmp.eq.s32.totalorder %s20, 0
      %p47 = por %p45, %p46
      %s49 = sadd.s32 %s48, 1
      %p52 = scmp.eq.s32.totalorder %s14, 1
      %p53 = scmp.ne.s32.totalorder %s48, %s50
      %p54 = scmp.eq.s32.totalorder %s14, 0
      %p55 = por %p53, %p54
      %p56 = scmp.ne.s32.totalorder %s48, %s50
      %p57 = scmp.eq.s32.totalorder %s19, 1
      %p58 = por %p56, %p57
      %p59 = scmp.ne.s32.totalorder %s50, %s51
      %p60 = scmp.eq.s32.totalorder %s19, 0
      %p61 = por %p59, %p60
      %p62 = scmp.ne.s32.totalorder %s50, %s51
      %p63 = scmp.eq.s32.totalorder %s20, 1
      %p64 = por %p62, %p63
      %p66 = scmp.ne.s32.totalorder %s51, %s65
      %p67 = scmp.eq.s32.totalorder %s20, 0
      %p68 = por %p66, %p67
      %s69 = ssub.s32 %s14, %s21
      %p70 = scmp.eq.s32.totalorder %s69, 0
      %s72 = sadd.s32 %s71, 1
      %s73 = scalar_select %p70, %s71, %s72
      %p76 = pneg %p70
      %p77 = scmp.eq.s32.totalorder %s14, 1
      %p78 = por %p76, %p77
      %p79 = scmp.ne.s32.totalorder %s71, %s74
      %p80 = scmp.eq.s32.totalorder %s14, 0
      %p81 = por %p79, %p80
      %p82 = scmp.ne.s32.totalorder %s71, %s74
      %p83 = scmp.eq.s32.totalorder %s19, 1
      %p84 = por %p82, %p83
      %p85 = scmp.ne.s32.totalorder %s74, %s75
      %p86 = scmp.eq.s32.totalorder %s19, 0
      %p87 = por %p85, %p86
      %p88 = scmp.ne.s32.totalorder %s74, %s75
      %p89 = scmp.eq.s32.totalorder %s20, 1
      %p90 = por %p88, %p89
      %p92 = scmp.ne.s32.totalorder %s75, %s91
      %p93 = scmp.eq.s32.totalorder %s20, 0
      %p94 = por %p92, %p93
      %p95 = scmp.le.s32.totalorder 1, %s14
      %p96 = scmp.lt.s32.totalorder %s14, 3
      %p97 = pnand %p95, %p96
      %p98 = pneg %p97
      // Predicated region
      $region9: #{rmsnorm.1} parent=5 // pred_check
        _
      $region10: #{rmsnorm.1} parent=5 // pred_check_branch
        %100 = sbr.rel (%p97) target = $region12
      $region11: #{rmsnorm.1} parent=5 // pred_region
        %s101 = ssub.s32 %s14, 1
        // Predicated region
        $region13: #{rmsnorm.1} parent=11 // pred_check
          %p102 = pneg %p61
        $region14: #{rmsnorm.1} parent=11 // pred_check_branch
          %104 = sbr.rel (%p102) target = $region16
        $region15: #{rmsnorm.1} parent=11 // pred_region
          _
        $region16: #{rmsnorm.1} parent=11 // pred_fallthru
          _
      $region12: #{rmsnorm.1} parent=5 // pred_fallthru
        _
      %p105 = scmp.lt.s32.totalorder %s14, 2
      // Predicated region
      $region17: #{rmsnorm.1} parent=5 // pred_check
        %p106 = pneg %p105
      $region18: #{rmsnorm.1} parent=5 // pred_check_branch
        %108 = sbr.rel (%p106) target = $region20
      $region19: #{rmsnorm.1} parent=5 // pred_region
        // Predicated region
        $region21: #{rmsnorm.1} parent=19 // pred_check
          %p109 = pneg %p34
        $region22: #{rmsnorm.1} parent=19 // pred_check_branch
          %111 = sbr.rel (%p109) target = $region24
        $region23: #{rmsnorm.1} parent=19 // pred_region
          %s112 = sand.u32 %s24, 1
          %s113 = scalar_lea.sflag [#allocation3], %s112
          %s114 = sand.u32 %s24, 1
          %s115 = smul.addr %s114, 16
          %s116 = scalar_lea.vmem [#allocation2], %s115
          %118 = vsyncadd %s113, 0
          %s119 = smul.addr %s14, 2
          %s120 = smul.addr %s119, 8
          %s121 = scalar_lea.hbm %s0, %s120
          %s123 = sshll.u32 %s121, 4
          %s124 = int_to_ptr.hbm [resolvable:$true] %s123
          %s125 = sshll.u32 %s116, 4
          %s126 = int_to_ptr.vmem [resolvable:$true] %s125
          %128 = dma.hbm_to_vmem [thread:$0]  %s124, 256, %s126, %s113
        $region24: #{rmsnorm.1} parent=19 // pred_fallthru
          _
      $region20: #{rmsnorm.1} parent=5 // pred_fallthru
        _
      %p129 = scmp.le.s32.totalorder 1, %s14
      %p130 = scmp.lt.s32.totalorder %s14, 3
      %p131 = pnand %p129, %p130
      %p132 = pneg %p131
      // Predicated region
      $region25: #{rmsnorm.1} parent=5 // pred_check
        _
      $region26: #{rmsnorm.1} parent=5 // pred_check_branch
        %134 = sbr.rel (%p131) target = $region28
      $region27: #{rmsnorm.1} parent=5 // pred_region
        %s135 = ssub.s32 %s14, 1
        %s136 = sand.u32 %s27, 1
        %s137 = scalar_lea.sflag [#allocation3], %s136
        %s138 = sand.u32 %s27, 1
        %s139 = smul.addr %s138, 16
        %s140 = scalar_lea.vmem [#allocation2], %s139
        // Predicated region
        $region29: #{rmsnorm.1} parent=27 // pred_check
          %p141 = pneg %p40
        $region30: #{rmsnorm.1} parent=27 // pred_check_branch
          %143 = sbr.rel (%p141) target = $region32
        $region31: #{rmsnorm.1} parent=27 // pred_region
          %145 = dma.done %s137, 256
        $region32: #{rmsnorm.1} parent=27 // pred_fallthru
          _
        %s146 = sand.u32 %s27, 1
        %s147 = scalar_lea.sflag [#allocation3], %s146
        %s148 = sand.u32 %s27, 1
        %s149 = smul.addr %s148, 16
        %s150 = scalar_lea.vmem [#allocation2], %s149
        %p151 = pneg %p40
        %p152 = pneg %p37
        %p153 = pneg %p61
        %p154 = pneg %p58
        %p155 = pneg %p87
        %p156 = pneg %p84
        %s157 = sand.u32 %s74, 1
        %s158 = scalar_lea.sflag [#allocation4], %s157
        %s159 = sand.u32 %s74, 1
        %s160 = smul.addr %s159, 16
        %s161 = scalar_lea.vmem [#allocation5], %s160
        %v162 = vld [vmem:[%s140] sm:$0xff]
        %v163 = vld [vmem:[%s140 + $0x8] sm:$0xff]
        %v164 = vmul.f32 %v162, %v162
        %v165 = vmul.f32 %v163, %v163
        %v166 = vadd.f32 %v164, %v165
        %167 = vadd.xlane.f32.xlu0 %v166
        %v168 = vpop.xlane.xlu0 %167
        %v169 = vrcp.pop 256.0
        %v170 = vmul.f32 256.0, %v169
        %v171 = vsub.f32 1.0, %v170
        %v172 = vmul.f32 %v169, %v171
        %v173 = vadd.f32 %v169, %v172
        %vm174 = vweird.f32 %v169
        %v175 = vsel %vm174, %v169, %v173
        %v176 = vmul.f32 %v168, %v175
        %v177 = vadd.f32 %v176, 1e-06
        %v178 = vrsqrt.pop %v177
        %v179 = vmul.f32 %v178, %v177
        %v180 = vmul.f32 %v179, %v178
        %v181 = vmul.f32 0.5, %v180
        %v182 = vsub.f32 1.5, %v181
        %v183 = vmul.f32 %v178, %v182
        %vm184 = vweird.f32 %v177
        %vm185 = vweird.f32 %v178
        %vm186 = vmor %vm184, %vm185
        %v187 = vsel %vm186, %v178, %v183
        %v188 = vmul.f32 %v162, %v187
        %v189 = vmul.f32 %v163, %v187
        %v190 = vld [vmem:[%s1] sm:$0x3]
        %v192 = vperm.slane %v190, 0
        %v193 = vperm.slane %v190, 1
        %v196 = vmul.f32 %v188, %v192
        %v197 = vmul.f32 %v189, %v193
        %198 = vst [vmem:[%s161] sm:$0xff] %v196
        %199 = vst [vmem:[%s161 + $0x8] sm:$0xff] %v197
        %s200 = sand.u32 %s74, 1
        %s201 = scalar_lea.sflag [#allocation4], %s200
        %s202 = sand.u32 %s74, 1
        %s203 = smul.addr %s202, 16
        %s204 = scalar_lea.vmem [#allocation5], %s203
        // Predicated region
        $region33: #{rmsnorm.1} parent=27 // pred_check
          %p205 = pneg %p84
        $region34: #{rmsnorm.1} parent=27 // pred_check_branch
          %207 = sbr.rel (%p205) target = $region36
        $region35: #{rmsnorm.1} parent=27 // pred_region
          %209 = vsyncadd %s201, 0
          %s210 = smul.addr %s19, 2
          %s211 = smul.addr %s210, 8
          %s212 = scalar_lea.hbm %s2, %s211
          %s214 = sshll.u32 %s204, 4
          %s215 = int_to_ptr.vmem [resolvable:$true] %s214
          %s216 = sshll.u32 %s212, 4
          %s217 = int_to_ptr.hbm [resolvable:$true] %s216
          %219 = dma.vmem_to_hbm [thread:$0]  %s215, 256, %s217, %s201
        $region36: #{rmsnorm.1} parent=27 // pred_fallthru
          _
      $region28: #{rmsnorm.1} parent=5 // pred_fallthru
        _
      %p220 = scmp.le.s32.totalorder 2, %s14
      // Predicated region
      $region37: #{rmsnorm.1} parent=5 // pred_check
        %p221 = pneg %p220
      $region38: #{rmsnorm.1} parent=5 // pred_check_branch
        %223 = sbr.rel (%p221) target = $region40
      $region39: #{rmsnorm.1} parent=5 // pred_region
        %s224 = ssub.s32 %s14, 2
        // Predicated region
        $region41: #{rmsnorm.1} parent=39 // pred_check
          %p225 = pneg %p90
        $region42: #{rmsnorm.1} parent=39 // pred_check_branch
          %227 = sbr.rel (%p225) target = $region44
        $region43: #{rmsnorm.1} parent=39 // pred_region
          %s228 = sand.u32 %s75, 1
          %s229 = scalar_lea.sflag [#allocation4], %s228
          %s230 = sand.u32 %s75, 1
          %s231 = smul.addr %s230, 16
          %s232 = scalar_lea.vmem [#allocation5], %s231
          %234 = dma.done %s229, 256
        $region44: #{rmsnorm.1} parent=39 // pred_fallthru
          _
      $region40: #{rmsnorm.1} parent=5 // pred_fallthru
        _
    $region6: #{rmsnorm.1} parent=1 // loop_footer
      %s18 = sadd.s32 1, %s14
    $region7: #{rmsnorm.1} parent=1 // loop_footer_branch
      %13 = sbr.rel target = $region3
    $region8: #{rmsnorm.1} parent=1 // loop_exit
      _
    %235 = vsyncpa [#allocation3], 1
    %s236 = scalar_lea.sflag [#allocation3], 1
    %237 = vsyncpa %s236, 1
    %238 = vsyncpa [#allocation4], 1
    %s239 = scalar_lea.sflag [#allocation4], 1
    %240 = vsyncpa %s239, 1

</llo_original>
